<compile_context>
chip_gen: v7x
topology: tpu7x:2x2x1
jax: 0.10.0
libtpu: 0.0.40
codegen_flags: <defaults>
</compile_context>

<pallas_src>
import numpy as np
import jax
import jax.numpy as jnp
from jax.experimental import pallas as pl
from jax.experimental.pallas import tpu as pltpu


def _tree_sum(vals):
    """Balanced-tree sum of a list of arrays (breaks the serial add chain)."""
    vals = list(vals)
    while len(vals) > 1:
        nxt = [vals[i] + vals[i + 1] for i in range(0, len(vals) - 1, 2)]
        if len(vals) % 2:
            nxt.append(vals[-1])
        vals = nxt
    return vals[0]


# ----------------------------------------------------------------------------
# Fused Critic kernel: V_nn (block-diag MLP) + Choquet (Mobius) + mean
# ----------------------------------------------------------------------------
def make_critic_kernel(agent_meta, n_nodes, out_dim):
    """agent_meta: static tuple of (center_node, neighbor_nodes, mobius_offset)."""
    inv_o = 1.0 / float(out_dim)
    num_agents = len(agent_meta)

    def critic_kernel(x_ref, w1_ref, b1_ref, w2_ref, b2_ref, mob_ref, out_ref):
        # --- V_nn: two block-diagonal matmuls (one MXU issue per layer).
        h = jnp.dot(x_ref[...], w1_ref[...],
                    preferred_element_type=jnp.float32)              # [B, N*H]
        h = jnp.maximum(h + b1_ref[...], 0.0)                        # ReLU
        q = jnp.dot(h, w2_ref[...],
                    preferred_element_type=jnp.float32) + b2_ref[...]  # [B, N*O]

        batch = q.shape[0]

        # Extract each node's [B, O] slab exactly once (static lane slices),
        # reused by both the center add and every subset of every agent.
        node_q = [q[:, n * out_dim:(n + 1) * out_dim] for n in range(n_nodes)]

        # --- Choquet integral per agent.  Subset minima via DP over bitmasks
        #     (min(S) = min(min(S\{j}), x_j)); head-averaged Mobius weights are
        #     SMEM scalars; terms combined with a balanced tree (no serial acc).
        agent_vals = []
        for center, nbrs, off in agent_meta:                          # static
            xs = [node_q[i] for i in nbrs]                            # [B, O]
            terms = [node_q[center]]                                  # + center
            mins = {}
            for mask in range(1, 1 << len(nbrs)):                     # unrolled
                j = (mask & -mask).bit_length() - 1                   # lowest bit
                rest = mask ^ (1 << j)
                mins[mask] = xs[j] if rest == 0 else jnp.minimum(mins[rest], xs[j])
                terms.append(mob_ref[off + mask - 1] * mins[mask])
            acc = _tree_sum(terms)                                    # [B, O]
            # feature mean: one lane reduction, single multiply by 1/O
            agent_vals.append(jnp.sum(acc, axis=1, keepdims=True) * inv_o)  # [B,1]

        # --- Output assembly via lane-iota select (no XLU lane-concat),
        #     single store of the [B, num_agents] result.
        col = jax.lax.broadcasted_iota(jnp.int32, (batch, num_agents), 1)
        out = jnp.zeros((batch, num_agents), jnp.float32)
        for a, v in enumerate(agent_vals):
            out = out + jnp.where(col == a,
                                  jnp.broadcast_to(v, (batch, num_agents)), 0.0)
        out_ref[...] = out

    return critic_kernel


def _block_diag(w):
    """[N, A, C] stacked per-node weights -> [N*A, N*C] block-diagonal matrix."""
    n, a, c = w.shape
    eye = jnp.eye(n, dtype=w.dtype)
    return jnp.einsum("nac,nm->namc", w, eye).reshape(n * a, n * c)


def critic_forward(obs, params, local_edges, heads):
    # obs: [B, N, H] (PyTorch layout).  Returns [B, num_agents].
    B, N, H = obs.shape
    O = params["w2"].shape[-1]

    # Block-diagonal weights + lane-packed biases (x_cat is a free reshape).
    x_cat = obs.reshape(B, N * H).astype(jnp.float32)                 # [B, N*H]
    w1_bd = _block_diag(params["w1"].astype(jnp.float32))             # [N*H, N*H]
    w2_bd = _block_diag(params["w2"].astype(jnp.float32))             # [N*H, N*O]
    b1_cat = params["b1"].astype(jnp.float32).reshape(1, N * H)       # [1, N*H]
    b2_cat = params["b2"].astype(jnp.float32).reshape(1, N * O)       # [1, N*O]

    # Pre-average Mobius weights over heads; concatenate across agents with
    # static offsets (single 1-D f32 SMEM array in the kernel).
    mob_avg = jnp.concatenate(
        [jnp.sum(m, axis=0) / float(heads) for m in params["mobius"]], axis=0
    ).astype(jnp.float32)

    agent_meta = []
    off = 0
    for le in local_edges:
        le = np.asarray(le)
        center = int(le[0, 0])
        nbrs = tuple(int(v) for v in le[0, 1:])
        agent_meta.append((center, nbrs, off))
        off += (1 << len(nbrs)) - 1
    agent_meta = tuple(agent_meta)
    num_agents = len(agent_meta)

    kernel = make_critic_kernel(agent_meta, N, O)
    vmem = pl.BlockSpec(memory_space=pltpu.MemorySpace.VMEM)
    smem = pl.BlockSpec(memory_space=pltpu.MemorySpace.SMEM)

    return pl.pallas_call(
        kernel,
        out_shape=jax.ShapeDtypeStruct((B, num_agents), jnp.float32),
        in_specs=[vmem, vmem, vmem, vmem, vmem, smem],
        out_specs=vmem,
    )(x_cat, w1_bd, b1_cat, w2_bd, b2_cat, mob_avg)


# ----------------------------------------------------------------------------
# Pure-JAX reference (for correctness check)
# ----------------------------------------------------------------------------
def nonempty_subsets(n):
    return [[(s >> i) & 1 for i in range(n)] for s in range(1, 2 ** n)]


def critic_reference(obs, params, local_edges, heads):
    h = jnp.einsum("bnh,nhk->bnk", obs, params["w1"]) + params["b1"][None, :, 0, :]
    h = jnp.maximum(h, 0.0)
    q = jnp.einsum("bnh,nho->bno", h, params["w2"]) + params["b2"][None, :, 0, :]
    outs = []
    for le, mob in zip(local_edges, params["mobius"]):
        center = int(le[0, 0])
        nbrs = np.asarray(le[0, 1:])
        x = q[:, nbrs, :]                                             # [B, n, O]
        acc = jnp.zeros((q.shape[0], q.shape[2]), jnp.float32)
        for s, bits in enumerate(nonempty_subsets(len(nbrs))):
            idx = [i for i, b in enumerate(bits) if b]
            cur = jnp.min(x[:, idx, :], axis=1)
            w = jnp.sum(mob[:, s]) / heads
            acc = acc + w * cur
        outs.append((acc + q[:, center, :]).mean(axis=1))
    return jnp.stack(outs, axis=1)


if __name__ == "__main__":
    # Small, module-consistent shapes
    B, H, O, N = 2, 32, 8, 6          # batch, hidden_nums, output_nums, node_nums
    heads = 3
    neighbor_nums = [3, 4]            # two agents; ChI gets nns-1 neighbors each

    key = jax.random.PRNGKey(0)
    k_obs, k_w1, k_b1, k_w2, k_b2, k_m0, k_m1 = jax.random.split(key, 7)

    obs = jax.random.normal(k_obs, (B, N, H), dtype=jnp.float32)

    params = {
        "w1": jax.random.normal(k_w1, (N, H, H), dtype=jnp.float32) / np.sqrt(H),
        "b1": jax.random.normal(k_b1, (N, 1, H), dtype=jnp.float32) * 0.01,
        "w2": jax.random.normal(k_w2, (N, H, O), dtype=jnp.float32) / np.sqrt(H),
        "b2": jax.random.normal(k_b2, (N, 1, O), dtype=jnp.float32) * 0.01,
        "mobius": [
            jax.random.normal(k_m0, (heads, 2 ** (neighbor_nums[0] - 1) - 1),
                              dtype=jnp.float32) * 0.1,
            jax.random.normal(k_m1, (heads, 2 ** (neighbor_nums[1] - 1) - 1),
                              dtype=jnp.float32) * 0.1,
        ],
    }

    # local_edges[i] has shape [2, neighbor_nums[i]]; row 0 = [center, neighbors...]
    local_edges = [
        np.array([[0, 1, 2], [0, 0, 0]], dtype=np.int32),
        np.array([[3, 4, 5, 1], [0, 0, 0, 0]], dtype=np.int32),
    ]

    out = critic_forward(obs, params, local_edges, heads)
    out = jax.block_until_ready(out)

    ref = jax.block_until_ready(critic_reference(obs, params, local_edges, heads))
    assert out.shape == (B, len(neighbor_nums)), out.shape
    assert np.allclose(np.asarray(out), np.asarray(ref), atol=1e-4, rtol=1e-4), (
        out, ref)

    print("KERNEL_OK")
</pallas_src>

<mosaic_0001>
module attributes {stable_mosaic.version = 11 : i64} {
  func.func @critic_kernel(%arg0: memref<2x192xf32, #tpu.memory_space<vmem>>, %arg1: memref<192x192xf32, #tpu.memory_space<vmem>>, %arg2: memref<1x192xf32, #tpu.memory_space<vmem>>, %arg3: memref<192x48xf32, #tpu.memory_space<vmem>>, %arg4: memref<1x48xf32, #tpu.memory_space<vmem>>, %arg5: memref<10xf32, #tpu.memory_space<smem>>, %arg6: memref<2x2xf32, #tpu.memory_space<vmem>>) attributes {dimension_semantics = [], scalar_prefetch = 0 : i64, scratch_operands = 0 : i64, tpu.core_type = #tpu.core_type<tc>} {
    %c0 = arith.constant 0 : index
    %c0_0 = arith.constant 0 : index
    %0 = vector.load %arg0[%c0, %c0_0] : memref<2x192xf32, #tpu.memory_space<vmem>>, vector<2x192xf32>
    %c0_1 = arith.constant 0 : index
    %c0_2 = arith.constant 0 : index
    %1 = vector.load %arg1[%c0_1, %c0_2] : memref<192x192xf32, #tpu.memory_space<vmem>>, vector<192x192xf32>
    %cst = arith.constant dense<0.000000e+00> : vector<2x192xf32>
    %2 = tpu.matmul %0, %1, %cst {dimension_numbers = #tpu.dot_dimension_numbers<[1], [0], [0], [1], [0, 0, 1, 1], [], []>} : vector<2x192xf32>, vector<192x192xf32>, vector<2x192xf32> -> vector<2x192xf32>
    %c0_3 = arith.constant 0 : index
    %c0_4 = arith.constant 0 : index
    %3 = vector.load %arg2[%c0_3, %c0_4] : memref<1x192xf32, #tpu.memory_space<vmem>>, vector<1x192xf32>
    %4 = vector.broadcast %3 : vector<1x192xf32> to vector<2x192xf32>
    %5 = arith.addf %2, %4 : vector<2x192xf32>
    %cst_5 = arith.constant 0.000000e+00 : f32
    %6 = vector.broadcast %cst_5 : f32 to vector<2x192xf32>
    %7 = arith.maximumf %5, %6 : vector<2x192xf32>
    %c0_6 = arith.constant 0 : index
    %c0_7 = arith.constant 0 : index
    %8 = vector.load %arg3[%c0_6, %c0_7] : memref<192x48xf32, #tpu.memory_space<vmem>>, vector<192x48xf32>
    %cst_8 = arith.constant dense<0.000000e+00> : vector<2x48xf32>
    %9 = tpu.matmul %7, %8, %cst_8 {dimension_numbers = #tpu.dot_dimension_numbers<[1], [0], [0], [1], [0, 0, 1, 1], [], []>} : vector<2x192xf32>, vector<192x48xf32>, vector<2x48xf32> -> vector<2x48xf32>
    %c0_9 = arith.constant 0 : index
    %c0_10 = arith.constant 0 : index
    %10 = vector.load %arg4[%c0_9, %c0_10] : memref<1x48xf32, #tpu.memory_space<vmem>>, vector<1x48xf32>
    %11 = vector.broadcast %10 : vector<1x48xf32> to vector<2x48xf32>
    %12 = arith.addf %9, %11 : vector<2x48xf32>
    %13 = vector.extract_strided_slice %12 {offsets = [0, 0], sizes = [2, 8], strides = [1, 1]} : vector<2x48xf32> to vector<2x8xf32>
    %14 = vector.extract_strided_slice %12 {offsets = [0, 8], sizes = [2, 8], strides = [1, 1]} : vector<2x48xf32> to vector<2x8xf32>
    %15 = vector.extract_strided_slice %12 {offsets = [0, 16], sizes = [2, 8], strides = [1, 1]} : vector<2x48xf32> to vector<2x8xf32>
    %16 = vector.extract_strided_slice %12 {offsets = [0, 24], sizes = [2, 8], strides = [1, 1]} : vector<2x48xf32> to vector<2x8xf32>
    %17 = vector.extract_strided_slice %12 {offsets = [0, 32], sizes = [2, 8], strides = [1, 1]} : vector<2x48xf32> to vector<2x8xf32>
    %18 = vector.extract_strided_slice %12 {offsets = [0, 40], sizes = [2, 8], strides = [1, 1]} : vector<2x48xf32> to vector<2x8xf32>
    %c0_11 = arith.constant 0 : index
    %19 = memref.load %arg5[%c0_11] : memref<10xf32, #tpu.memory_space<smem>>
    %20 = vector.broadcast %19 : f32 to vector<2x8xf32>
    %21 = arith.mulf %20, %14 : vector<2x8xf32>
    %c1 = arith.constant 1 : index
    %22 = memref.load %arg5[%c1] : memref<10xf32, #tpu.memory_space<smem>>
    %23 = vector.broadcast %22 : f32 to vector<2x8xf32>
    %24 = arith.mulf %23, %15 : vector<2x8xf32>
    %25 = arith.minimumf %15, %14 : vector<2x8xf32>
    %c2 = arith.constant 2 : index
    %26 = memref.load %arg5[%c2] : memref<10xf32, #tpu.memory_space<smem>>
    %27 = vector.broadcast %26 : f32 to vector<2x8xf32>
    %28 = arith.mulf %27, %25 : vector<2x8xf32>
    %29 = arith.addf %13, %21 : vector<2x8xf32>
    %30 = arith.addf %24, %28 : vector<2x8xf32>
    %31 = arith.addf %29, %30 : vector<2x8xf32>
    %cst_12 = arith.constant dense<0.000000e+00> : vector<2xf32>
    %32 = vector.multi_reduction <add>, %31, %cst_12 [1] : vector<2x8xf32> to vector<2xf32>
    %33 = vector.shape_cast %32 : vector<2xf32> to vector<2x1xf32>
    %cst_13 = arith.constant 1.250000e-01 : f32
    %34 = vector.broadcast %cst_13 : f32 to vector<2x1xf32>
    %35 = arith.mulf %33, %34 : vector<2x1xf32>
    %c3 = arith.constant 3 : index
    %36 = memref.load %arg5[%c3] : memref<10xf32, #tpu.memory_space<smem>>
    %37 = vector.broadcast %36 : f32 to vector<2x8xf32>
    %38 = arith.mulf %37, %17 : vector<2x8xf32>
    %c4 = arith.constant 4 : index
    %39 = memref.load %arg5[%c4] : memref<10xf32, #tpu.memory_space<smem>>
    %40 = vector.broadcast %39 : f32 to vector<2x8xf32>
    %41 = arith.mulf %40, %18 : vector<2x8xf32>
    %42 = arith.minimumf %18, %17 : vector<2x8xf32>
    %c5 = arith.constant 5 : index
    %43 = memref.load %arg5[%c5] : memref<10xf32, #tpu.memory_space<smem>>
    %44 = vector.broadcast %43 : f32 to vector<2x8xf32>
    %45 = arith.mulf %44, %42 : vector<2x8xf32>
    %c6 = arith.constant 6 : index
    %46 = memref.load %arg5[%c6] : memref<10xf32, #tpu.memory_space<smem>>
    %47 = vector.broadcast %46 : f32 to vector<2x8xf32>
    %48 = arith.mulf %47, %14 : vector<2x8xf32>
    %49 = arith.minimumf %14, %17 : vector<2x8xf32>
    %c7 = arith.constant 7 : index
    %50 = memref.load %arg5[%c7] : memref<10xf32, #tpu.memory_space<smem>>
    %51 = vector.broadcast %50 : f32 to vector<2x8xf32>
    %52 = arith.mulf %51, %49 : vector<2x8xf32>
    %53 = arith.minimumf %14, %18 : vector<2x8xf32>
    %c8 = arith.constant 8 : index
    %54 = memref.load %arg5[%c8] : memref<10xf32, #tpu.memory_space<smem>>
    %55 = vector.broadcast %54 : f32 to vector<2x8xf32>
    %56 = arith.mulf %55, %53 : vector<2x8xf32>
    %57 = arith.minimumf %53, %17 : vector<2x8xf32>
    %c9 = arith.constant 9 : index
    %58 = memref.load %arg5[%c9] : memref<10xf32, #tpu.memory_space<smem>>
    %59 = vector.broadcast %58 : f32 to vector<2x8xf32>
    %60 = arith.mulf %59, %57 : vector<2x8xf32>
    %61 = arith.addf %16, %38 : vector<2x8xf32>
    %62 = arith.addf %41, %45 : vector<2x8xf32>
    %63 = arith.addf %48, %52 : vector<2x8xf32>
    %64 = arith.addf %56, %60 : vector<2x8xf32>
    %65 = arith.addf %61, %62 : vector<2x8xf32>
    %66 = arith.addf %63, %64 : vector<2x8xf32>
    %67 = arith.addf %65, %66 : vector<2x8xf32>
    %cst_14 = arith.constant dense<0.000000e+00> : vector<2xf32>
    %68 = vector.multi_reduction <add>, %67, %cst_14 [1] : vector<2x8xf32> to vector<2xf32>
    %69 = vector.shape_cast %68 : vector<2xf32> to vector<2x1xf32>
    %cst_15 = arith.constant 1.250000e-01 : f32
    %70 = vector.broadcast %cst_15 : f32 to vector<2x1xf32>
    %71 = arith.mulf %69, %70 : vector<2x1xf32>
    %72 = tpu.iota {dimensions = array<i32: 1>} : vector<2x2xi32>
    %cst_16 = arith.constant 0.000000e+00 : f32
    %73 = vector.broadcast %cst_16 : f32 to vector<2x2xf32>
    %c0_i32 = arith.constant 0 : i32
    %74 = vector.broadcast %c0_i32 : i32 to vector<2x2xi32>
    %75 = arith.cmpi eq, %72, %74 : vector<2x2xi32>
    %76 = vector.shape_cast %35 : vector<2x1xf32> to vector<2x1xf32>
    %77 = vector.broadcast %76 : vector<2x1xf32> to vector<2x2xf32>
    %cst_17 = arith.constant 0.000000e+00 : f32
    %78 = vector.broadcast %cst_17 : f32 to vector<2x2xf32>
    %79 = arith.select %75, %77, %78 : vector<2x2xi1>, vector<2x2xf32>
    %80 = arith.addf %73, %79 : vector<2x2xf32>
    %c1_i32 = arith.constant 1 : i32
    %81 = vector.broadcast %c1_i32 : i32 to vector<2x2xi32>
    %82 = arith.cmpi eq, %72, %81 : vector<2x2xi32>
    %83 = vector.shape_cast %71 : vector<2x1xf32> to vector<2x1xf32>
    %84 = vector.broadcast %83 : vector<2x1xf32> to vector<2x2xf32>
    %cst_18 = arith.constant 0.000000e+00 : f32
    %85 = vector.broadcast %cst_18 : f32 to vector<2x2xf32>
    %86 = arith.select %82, %84, %85 : vector<2x2xi1>, vector<2x2xf32>
    %87 = arith.addf %80, %86 : vector<2x2xf32>
    %c0_19 = arith.constant 0 : index
    %c0_20 = arith.constant 0 : index
    %88 = vector.load %arg6[%c0_19, %c0_20] : memref<2x2xf32, #tpu.memory_space<vmem>>, vector<2x2xf32>
    tpu.vector_store %arg6[%c0_19, %c0_20], %87 {strides = array<i32>} : memref<2x2xf32, #tpu.memory_space<vmem>>, vector<2x2xf32>,
    return
  }
}

</mosaic_0001>

<llo_original>
// kernel: tpu_custom_call.1
$region0: #{tpu_custom_call.1}
  #allocation0 [shape = 'u32[]', space=smem, size = 0x4, offset = 0x4, fixed_abs, tag = 'smem constant byte address 0x4 - core index']
  #allocation1 [shape = 'u32[144,128]{1,0:T(1,128)}', space=vmem, size = 0x12000, scoped, tag = 'internal scratch']
  %s0 = inlined_call_operand.vmem [shape: f32[2,192], index: 0, kind: input, shape index: {}]
  %s1 = inlined_call_operand.hbm [shape: f32[192,192], index: 1, kind: input, shape index: {}]
  %s2 = inlined_call_operand.vmem [shape: f32[1,192], index: 2, kind: input, shape index: {}]
  %s3 = inlined_call_operand.vmem [shape: f32[192,48], index: 3, kind: input, shape index: {}]
  %s4 = inlined_call_operand.vmem [shape: f32[1,48], index: 4, kind: input, shape index: {}]
  %s5 = inlined_call_operand.vmem [shape: f32[10], index: 5, kind: input, shape index: {}]
  %s6 = inlined_call_operand.hbm [shape: f32[2,2], index: 6, kind: output, shape index: {}]
  %s7 = sld [smem:[#allocation0]]
  $region42: #{tpu_custom_call.1} parent=0
    _
  %s9 = ssub.s32 1, %s7
  %s10 = scalar_select 0, %s9, %s7
  $region1: #{tpu_custom_call.1} parent=0
    #allocation2 [shape = 'u8[196608]{0}', space=vmem, size = 0x30000, scoped, tag = 'input window, operand 1, single buffered']
    #allocation3 [shape = 's32[1]{0}', space=sflag, size = 0x4, scoped, tag = 'scoped memory for tpu_custom_call.1']
    #allocation4 [shape = 's32[1]{0}', space=sflag, size = 0x4, scoped, tag = 'scoped memory for tpu_custom_call.1']
    #allocation5 [shape = 's32[1]{0}', space=sflag, size = 0x4, scoped, tag = 'scoped memory for tpu_custom_call.1']
    #allocation6 [shape = 'u8[512]{0}', space=smem, size = 0x200, scoped, tag = 'input window, operand 5, single buffered']
    #allocation7 [shape = 'u8[1024]{0}', space=vmem, size = 0x400, scoped, tag = 'output window, operand 0, single buffered']
    %11 = vsyncpa [#allocation3], 0
    %12 = vsyncpa [#allocation5], 0
    %13 = vsyncpa [#allocation4], 0
    // Predicated region
    $region2: #{tpu_custom_call.1} parent=1 // pred_check
      _
    $region3: #{tpu_custom_call.1} parent=1 // pred_check_branch
      %15 = sbr.rel (0) target = $region5
    $region4: #{tpu_custom_call.1} parent=1 // pred_region
      _
    $region5: #{tpu_custom_call.1} parent=1 // pred_fallthru
      _
    // Predicated region
    $region6: #{tpu_custom_call.1} parent=1 // pred_check
      _
    $region7: #{tpu_custom_call.1} parent=1 // pred_check_branch
      %17 = sbr.rel (0) target = $region9
    $region8: #{tpu_custom_call.1} parent=1 // pred_region
      %s19 = ssub.s32 6144, 6144
      %20 = vsyncadd [#allocation3], %s19
      %s21 = sshll.u32 [#allocation2], 4
      %s22 = int_to_ptr.vmem [resolvable:$true] %s21
      %27 = dma.hbm_to_vmem [thread:$0]  %s1, 6144, %s22, [#allocation3], 256, 256, 16
    $region9: #{tpu_custom_call.1} parent=1 // pred_fallthru
      _
    // Predicated region
    $region10: #{tpu_custom_call.1} parent=1 // pred_check
      _
    $region11: #{tpu_custom_call.1} parent=1 // pred_check_branch
      %29 = sbr.rel (0) target = $region13
    $region12: #{tpu_custom_call.1} parent=1 // pred_region
      _
    $region13: #{tpu_custom_call.1} parent=1 // pred_fallthru
      _
    // Predicated region
    $region14: #{tpu_custom_call.1} parent=1 // pred_check
      _
    $region15: #{tpu_custom_call.1} parent=1 // pred_check_branch
      %31 = sbr.rel (0) target = $region17
    $region16: #{tpu_custom_call.1} parent=1 // pred_region
      _
    $region17: #{tpu_custom_call.1} parent=1 // pred_fallthru
      _
    // Predicated region
    $region18: #{tpu_custom_call.1} parent=1 // pred_check
      _
    $region19: #{tpu_custom_call.1} parent=1 // pred_check_branch
      %33 = sbr.rel (0) target = $region21
    $region20: #{tpu_custom_call.1} parent=1 // pred_region
      _
    $region21: #{tpu_custom_call.1} parent=1 // pred_fallthru
      _
    // Predicated region
    $region22: #{tpu_custom_call.1} parent=1 // pred_check
      _
    $region23: #{tpu_custom_call.1} parent=1 // pred_check_branch
      %35 = sbr.rel (0) target = $region25
    $region24: #{tpu_custom_call.1} parent=1 // pred_region
      %s37 = ssub.s32 16, 16
      %38 = vsyncadd [#allocation5], %s37
      %s40 = sshll.u32 %s5, 4
      %s41 = int_to_ptr.vmem [resolvable:$true] %s40
      %43 = dma.vmem_to_smem %s41, 16, [#allocation6], [#allocation5]
    $region25: #{tpu_custom_call.1} parent=1 // pred_fallthru
      _
    // Predicated region
    $region26: #{tpu_custom_call.1} parent=1 // pred_check
      _
    $region27: #{tpu_custom_call.1} parent=1 // pred_check_branch
      %45 = sbr.rel (0) target = $region29
    $region28: #{tpu_custom_call.1} parent=1 // pred_region
      %46 = dma.done [#allocation3], 6144
    $region29: #{tpu_custom_call.1} parent=1 // pred_fallthru
      _
    // Predicated region
    $region30: #{tpu_custom_call.1} parent=1 // pred_check
      _
    $region31: #{tpu_custom_call.1} parent=1 // pred_check_branch
      %48 = sbr.rel (0) target = $region33
    $region32: #{tpu_custom_call.1} parent=1 // pred_region
      %49 = dma.done [#allocation5], 16
    $region33: #{tpu_custom_call.1} parent=1 // pred_fallthru
      _
    %50 = sfence
    %v51 = vld [vmem:[%s0] sm:$0xf]
    %v52 = vld [vmem:[#allocation2] sm:$0xff]
    %v53 = vld [vmem:[#allocation2 + $0x8] sm:$0xff]
    %v54 = vld [vmem:[#allocation2 + $0x10] sm:$0xff]
    %v55 = vld [vmem:[#allocation2 + $0x18] sm:$0xff]
    %v56 = vld [vmem:[#allocation2 + $0x20] sm:$0xff]
    %v57 = vld [vmem:[#allocation2 + $0x28] sm:$0xff]
    %v58 = vld [vmem:[#allocation2 + $0x30] sm:$0xff]
    %v59 = vld [vmem:[#allocation2 + $0x38] sm:$0xff]
    %v60 = vld [vmem:[#allocation2 + $0x40] sm:$0xff]
    %v61 = vld [vmem:[#allocation2 + $0x48] sm:$0xff]
    %v62 = vld [vmem:[#allocation2 + $0x50] sm:$0xff]
    %v63 = vld [vmem:[#allocation2 + $0x58] sm:$0xff]
    %v64 = vld [vmem:[#allocation2 + $0x60] sm:$0xff]
    %v65 = vld [vmem:[#allocation2 + $0x68] sm:$0xff]
    %v66 = vld [vmem:[#allocation2 + $0x70] sm:$0xff]
    %v67 = vld [vmem:[#allocation2 + $0x78] sm:$0xff]
    %v68 = vld [vmem:[#allocation2 + $0x80] sm:$0xff]
    %v69 = vld [vmem:[#allocation2 + $0x88] sm:$0xff]
    %v70 = vld [vmem:[#allocation2 + $0x90] sm:$0xff]
    %v71 = vld [vmem:[#allocation2 + $0x98] sm:$0xff]
    %v72 = vld [vmem:[#allocation2 + $0xa0] sm:$0xff]
    %v73 = vld [vmem:[#allocation2 + $0xa8] sm:$0xff]
    %v74 = vld [vmem:[#allocation2 + $0xb0] sm:$0xff]
    %v75 = vld [vmem:[#allocation2 + $0xb8] sm:$0xff]
    %v76 = vld [vmem:[#allocation2 + $0xc0] sm:$0xff]
    %v77 = vld [vmem:[#allocation2 + $0xc8] sm:$0xff]
    %v78 = vld [vmem:[#allocation2 + $0xd0] sm:$0xff]
    %v79 = vld [vmem:[#allocation2 + $0xd8] sm:$0xff]
    %v80 = vld [vmem:[#allocation2 + $0xe0] sm:$0xff]
    %v81 = vld [vmem:[#allocation2 + $0xe8] sm:$0xff]
    %v82 = vld [vmem:[#allocation2 + $0xf0] sm:$0xff]
    %v83 = vld [vmem:[#allocation2 + $0xf8] sm:$0xff]
    %v84 = vld [vmem:[#allocation2 + $0x100] sm:$0xff]
    %v85 = vld [vmem:[#allocation2 + $0x108] sm:$0xff]
    %v86 = vld [vmem:[#allocation2 + $0x110] sm:$0xff]
    %v87 = vld [vmem:[#allocation2 + $0x118] sm:$0xff]
    %v88 = vld [vmem:[#allocation2 + $0x120] sm:$0xff]
    %v89 = vld [vmem:[#allocation2 + $0x128] sm:$0xff]
    %v90 = vld [vmem:[#allocation2 + $0x130] sm:$0xff]
    %v91 = vld [vmem:[#allocation2 + $0x138] sm:$0xff]
    %v92 = vld [vmem:[#allocation2 + $0x140] sm:$0xff]
    %v93 = vld [vmem:[#allocation2 + $0x148] sm:$0xff]
    %v94 = vld [vmem:[#allocation2 + $0x150] sm:$0xff]
    %v95 = vld [vmem:[#allocation2 + $0x158] sm:$0xff]
    %v96 = vld [vmem:[#allocation2 + $0x160] sm:$0xff]
    %v97 = vld [vmem:[#allocation2 + $0x168] sm:$0xff]
    %v98 = vld [vmem:[#allocation2 + $0x170] sm:$0xff]
    %v99 = vld [vmem:[#allocation2 + $0x178] sm:$0xff]
    %v100 = vld [vmem:[%s2] sm:$0x3]
    %v102 = vlaneseq
    %v103 = vshrl.u32 %v102, 7
    %v104 = vsub.s32 0, %v103
    %v105 = vrot.slane %v100, %v104
    %v106 = vlaneseq
    %v107 = vshrl.u32 %v106, 7
    %v108 = vsub.s32 1, %v107
    %v109 = vrot.slane %v100, %v108
    %v114 = vunpack.c.l.s4 1983009808
    %v115 = vunpack.c.0.s8 %v114
    %v116 = vlaneseq
    %v117 = vshrl.u32 %v116, 7
    %v118 = vsub.s32 %v115, %v117
    %v119 = vrot.slane %v51, %v118
    %v120 = vcombine.high %v119, %v119
    %vm122 = vcmask 523264
    %v123 = vsel %vm122, %v120, 0
    %125 = vmatprep.subr.mxu0 %v53
    %126 = vmatpush1.msra.mxu0 %v52
    %127 = vmatprep.subr.mxu0 %v55
    %128 = vmatpush1.msra.mxu0 %v54
    %129 = vmatprep.subr.mxu0 %v57
    %130 = vmatpush1.msra.mxu0 %v56
    %131 = vmatprep.subr.mxu0 %v59
    %132 = vmatpush1.msra.mxu0 %v58
    %133 = vmatprep.subr.mxu0 %v61
    %134 = vmatpush1.msra.mxu0 %v60
    %135 = vmatprep.subr.mxu0 %v63
    %136 = vmatpush1.msra.mxu0 %v62
    %137 = vmatprep.subr.mxu0 %v65
    %138 = vmatpush1.msra.mxu0 %v64
    %139 = vmatprep.subr.mxu0 %v67
    %140 = vmatpush1.msra.mxu0 %v66
    %141 = vmatprep.subr.mxu0 %v69
    %142 = vmatpush1.msra.mxu0 %v68
    %143 = vmatprep.subr.mxu0 %v71
    %144 = vmatpush1.msra.mxu0 %v70
    %145 = vmatprep.subr.mxu0 %v73
    %146 = vmatpush1.msra.mxu0 %v72
    %147 = vmatprep.subr.mxu0 %v75
    %148 = vmatpush1.msra.mxu0 %v74
    %149 = vmatprep.subr.mxu0 %v77
    %150 = vmatpush1.msra.mxu0 %v76
    %151 = vmatprep.subr.mxu0 %v79
    %152 = vmatpush1.msra.mxu0 %v78
    %153 = vmatprep.subr.mxu0 %v81
    %154 = vmatpush1.msra.mxu0 %v80
    %155 = vmatprep.subr.mxu0 %v83
    %156 = vmatpush1.msra.mxu0 %v82
    %157 = vmatprep.subr.mxu0 %v85
    %158 = vmatpush1.msra.mxu0 %v84
    %159 = vmatprep.subr.mxu0 %v87
    %160 = vmatpush1.msra.mxu0 %v86
    %161 = vmatprep.subr.mxu0 %v89
    %162 = vmatpush1.msra.mxu0 %v88
    %163 = vmatprep.subr.mxu0 %v91
    %164 = vmatpush1.msra.mxu0 %v90
    %165 = vmatprep.subr.mxu0 %v93
    %166 = vmatpush1.msra.mxu0 %v92
    %167 = vmatprep.subr.mxu0 %v95
    %168 = vmatpush1.msra.mxu0 %v94
    %169 = vmatprep.subr.mxu0 %v97
    %170 = vmatpush1.msra.mxu0 %v96
    %171 = vmatprep.subr.mxu0 %v99
    %172 = vmatpush1.msra.mxu0 %v98
    %173 = vmatprep.subr.mxu0 0.0
    %174 = vmatpush1.msra.mxu0 0.0
    %175 = vmatprep.subr.mxu0 0.0
    %176 = vmatpush1.msra.mxu0 0.0
    %177 = vmatprep.subr.mxu0 0.0
    %178 = vmatpush1.msra.mxu0 0.0
    %179 = vmatprep.subr.mxu0 0.0
    %180 = vmatpush1.msra.mxu0 0.0
    %181 = vmatprep.subr.mxu0 0.0
    %182 = vmatpush1.msra.mxu0 0.0
    %183 = vmatprep.subr.mxu0 0.0
    %184 = vmatpush1.msra.mxu0 0.0
    %185 = vmatprep.subr.mxu0 0.0
    %186 = vmatpush1.msra.mxu0 0.0
    %187 = vmatprep.subr.mxu0 0.0
    %188 = vmatpush1.msra.mxu0 0.0
    %189 = vmatprep.mubr.f32.mxu0 %v123
    %190 = vmatmul.mubr.f32.gmra.mrb[0].mxu0 %v119
    %v191 = vpop.f32.mrb[0].mxu0
    %v192 = vadd.f32 %v105, %v191
    %v193 = vpop.f32.mrb[0].mxu0
    %v194 = vadd.f32 %v109, %v193
    %195 = vdwg.mxu0
    %v196 = vmax.f32 %v192, 0.0
    %v197 = vmax.f32 %v194, 0.0
    %v198 = vld [vmem:[%s3] sm:$0xff]
    %v199 = vld [vmem:[%s3 + $0x8] sm:$0xff]
    %v200 = vld [vmem:[%s3 + $0x10] sm:$0xff]
    %v201 = vld [vmem:[%s3 + $0x18] sm:$0xff]
    %v202 = vld [vmem:[%s3 + $0x20] sm:$0xff]
    %v203 = vld [vmem:[%s3 + $0x28] sm:$0xff]
    %v204 = vld [vmem:[%s3 + $0x30] sm:$0xff]
    %v205 = vld [vmem:[%s3 + $0x38] sm:$0xff]
    %v206 = vld [vmem:[%s3 + $0x40] sm:$0xff]
    %v207 = vld [vmem:[%s3 + $0x48] sm:$0xff]
    %v208 = vld [vmem:[%s3 + $0x50] sm:$0xff]
    %v209 = vld [vmem:[%s3 + $0x58] sm:$0xff]
    %v210 = vld [vmem:[%s3 + $0x60] sm:$0xff]
    %v211 = vld [vmem:[%s3 + $0x68] sm:$0xff]
    %v212 = vld [vmem:[%s3 + $0x70] sm:$0xff]
    %v213 = vld [vmem:[%s3 + $0x78] sm:$0xff]
    %v214 = vld [vmem:[%s3 + $0x80] sm:$0xff]
    %v215 = vld [vmem:[%s3 + $0x88] sm:$0xff]
    %v216 = vld [vmem:[%s3 + $0x90] sm:$0xff]
    %v217 = vld [vmem:[%s3 + $0x98] sm:$0xff]
    %v218 = vld [vmem:[%s3 + $0xa0] sm:$0xff]
    %v219 = vld [vmem:[%s3 + $0xa8] sm:$0xff]
    %v220 = vld [vmem:[%s3 + $0xb0] sm:$0xff]
    %v221 = vld [vmem:[%s3 + $0xb8] sm:$0xff]
    %v222 = vld [vmem:[%s4] sm:$0x1]
    %v224 = vlaneseq
    %v225 = vshrl.u32 %v224, 7
    %v226 = vsub.s32 0, %v225
    %v227 = vrot.slane %v222, %v226
    %v230 = vsel %vm122, %v197, 0
    %232 = vmatprep.subr.mxu0 0.0
    %233 = vmatpush1.msra.mxu0 %v198
    %234 = vmatprep.subr.mxu0 0.0
    %235 = vmatpush1.msra.mxu0 %v199
    %236 = vmatprep.subr.mxu0 0.0
    %237 = vmatpush1.msra.mxu0 %v200
    %238 = vmatprep.subr.mxu0 0.0
    %239 = vmatpush1.msra.mxu0 %v201
    %240 = vmatprep.subr.mxu0 0.0
    %241 = vmatpush1.msra.mxu0 %v202
    %242 = vmatprep.subr.mxu0 0.0
    %243 = vmatpush1.msra.mxu0 %v203
    %244 = vmatprep.subr.mxu0 0.0
    %245 = vmatpush1.msra.mxu0 %v204
    %246 = vmatprep.subr.mxu0 0.0
    %247 = vmatpush1.msra.mxu0 %v205
    %248 = vmatprep.subr.mxu0 0.0
    %249 = vmatpush1.msra.mxu0 %v206
    %250 = vmatprep.subr.mxu0 0.0
    %251 = vmatpush1.msra.mxu0 %v207
    %252 = vmatprep.subr.mxu0 0.0
    %253 = vmatpush1.msra.mxu0 %v208
    %254 = vmatprep.subr.mxu0 0.0
    %255 = vmatpush1.msra.mxu0 %v209
    %256 = vmatprep.subr.mxu0 0.0
    %257 = vmatpush1.msra.mxu0 %v210
    %258 = vmatprep.subr.mxu0 0.0
    %259 = vmatpush1.msra.mxu0 %v211
    %260 = vmatprep.subr.mxu0 0.0
    %261 = vmatpush1.msra.mxu0 %v212
    %262 = vmatprep.subr.mxu0 0.0
    %263 = vmatpush1.msra.mxu0 %v213
    %264 = vmatprep.subr.mxu0 0.0
    %265 = vmatpush1.msra.mxu0 %v214
    %266 = vmatprep.subr.mxu0 0.0
    %267 = vmatpush1.msra.mxu0 %v215
    %268 = vmatprep.subr.mxu0 0.0
    %269 = vmatpush1.msra.mxu0 %v216
    %270 = vmatprep.subr.mxu0 0.0
    %271 = vmatpush1.msra.mxu0 %v217
    %272 = vmatprep.subr.mxu0 0.0
    %273 = vmatpush1.msra.mxu0 %v218
    %274 = vmatprep.subr.mxu0 0.0
    %275 = vmatpush1.msra.mxu0 %v219
    %276 = vmatprep.subr.mxu0 0.0
    %277 = vmatpush1.msra.mxu0 %v220
    %278 = vmatprep.subr.mxu0 0.0
    %279 = vmatpush1.msra.mxu0 %v221
    %280 = vmatprep.subr.mxu0 0.0
    %281 = vmatpush1.msra.mxu0 0.0
    %282 = vmatprep.subr.mxu0 0.0
    %283 = vmatpush1.msra.mxu0 0.0
    %284 = vmatprep.subr.mxu0 0.0
    %285 = vmatpush1.msra.mxu0 0.0
    %286 = vmatprep.subr.mxu0 0.0
    %287 = vmatpush1.msra.mxu0 0.0
    %288 = vmatprep.subr.mxu0 0.0
    %289 = vmatpush1.msra.mxu0 0.0
    %290 = vmatprep.subr.mxu0 0.0
    %291 = vmatpush1.msra.mxu0 0.0
    %292 = vmatprep.subr.mxu0 0.0
    %293 = vmatpush1.msra.mxu0 0.0
    %294 = vmatprep.subr.mxu0 0.0
    %295 = vmatpush1.msra.mxu0 0.0
    %296 = vmatprep.mubr.f32.mxu0 %v230
    %297 = vmatmul.mubr.f32.gmra.mrb[0].mxu0 %v196
    %v298 = vpop.f32.mrb[0].mxu0
    %v299 = vadd.f32 %v227, %v298
    %v300 = vpop.f32.mrb[0].mxu0
    %301 = vdwg.mxu0
    %s302 = sld [smem:[#allocation6]]
    %v303 = vstv %s302
    %v304 = vmul.f32 %v303, %v299
    %s305 = sld [smem:[#allocation6 + $0x1]]
    %v306 = vstv %s305
    %v307 = vmul.f32 %v306, %v299
    %309 = vrot.lane.b32.xlu0 %v299, 8
    %v310 = vpop.permute.xlu0 %309
    %v312 = vmin.f32 %v299, %v310
    %s313 = sld [smem:[#allocation6 + $0x2]]
    %v314 = vstv %s313
    %v315 = vmul.f32 %v314, %v312
    %317 = vrot.lane.b32.xlu0 %v304, 120
    %v318 = vpop.permute.xlu0 %317
    %v320 = vadd.f32 %v299, %v318
    %v321 = vadd.f32 %v307, %v315
    %323 = vrot.lane.b32.xlu0 %v321, 112
    %v324 = vpop.permute.xlu0 %323
    %v326 = vadd.f32 %v320, %v324
    %vm327 = vcmask 58368
    %v328 = vsel %vm327, %v326, 0.0
    %329 = vadd.xlane.f32.xlu0 %v328
    %v330 = vpop.xlane.xlu0 %329
    %v331 = vmul.f32 %v330, 0.125
    %s332 = sld [smem:[#allocation6 + $0x3]]
    %v333 = vstv %s332
    %v334 = vmul.f32 %v333, %v299
    %s335 = sld [smem:[#allocation6 + $0x4]]
    %v336 = vstv %s335
    %v337 = vmul.f32 %v336, %v299
    %s338 = sld [smem:[#allocation6 + $0x5]]
    %v339 = vstv %s338
    %v340 = vmul.f32 %v339, %v312
    %s341 = sld [smem:[#allocation6 + $0x6]]
    %v342 = vstv %s341
    %v343 = vmul.f32 %v342, %v299
    %344 = vrot.lane.b32.xlu0 %v299, 104
    %v345 = vpop.permute.xlu0 %344
    %v347 = vmin.f32 %v299, %v345
    %s348 = sld [smem:[#allocation6 + $0x7]]
    %v349 = vstv %s348
    %v350 = vmul.f32 %v349, %v347
    %351 = vrot.lane.b32.xlu0 %v299, 96
    %v352 = vpop.permute.xlu0 %351
    %v354 = vmin.f32 %v299, %v352
    %s355 = sld [smem:[#allocation6 + $0x8]]
    %v356 = vstv %s355
    %v357 = vmul.f32 %v356, %v354
    %v358 = vmin.f32 %v354, %v345
    %s359 = sld [smem:[#allocation6 + $0x9]]
    %v360 = vstv %s359
    %v361 = vmul.f32 %v360, %v358
    %363 = vrot.lane.b32.xlu0 %v334, 120
    %v364 = vpop.permute.xlu0 %363
    %v366 = vadd.f32 %v299, %v364
    %v367 = vadd.f32 %v337, %v340
    %v368 = vadd.f32 %v343, %v350
    %v369 = vadd.f32 %v357, %v361
    %371 = vrot.lane.b32.xlu0 %v367, 112
    %v372 = vpop.permute.xlu0 %371
    %v374 = vadd.f32 %v366, %v372
    %v375 = vadd.f32 %v368, %v369
    %377 = vrot.lane.b32.xlu0 %v375, 16
    %v378 = vpop.permute.xlu0 %377
    %v380 = vadd.f32 %v374, %v378
    %382 = vrot.lane.b32.xlu0 %v380, 104
    %v383 = vpop.permute.xlu0 %382
    %v385 = vsel %vm327, %v383, 0.0
    %386 = vadd.xlane.f32.xlu0 %v385
    %v387 = vpop.xlane.xlu0 %386
    %v388 = vmul.f32 %v387, 0.125
    %v389 = vlaneseq
    %v390 = vand.u32 %v389, 127
    %vm391 = vcmp.eq.s32.totalorder %v390, 0
    %v392 = vsel %vm391, %v331, 0.0
    %v393 = vadd.f32 %v392, 0.0
    %vm394 = vcmp.eq.s32.totalorder %v390, 1
    %v395 = vsel %vm394, %v388, 0.0
    %v396 = vadd.f32 %v393, %v395
    %vm397 = vcmask 9216
    %398 = vst.msk [vmem:[#allocation7] sm:$0x3] %vm397, %v396
    // Predicated region
    $region34: #{tpu_custom_call.1} parent=1 // pred_check
      _
    $region35: #{tpu_custom_call.1} parent=1 // pred_check_branch
      %400 = sbr.rel (0) target = $region37
    $region36: #{tpu_custom_call.1} parent=1 // pred_region
      %s402 = ssub.s32 32, 32
      %403 = vsyncadd [#allocation4], %s402
      %s405 = sshll.u32 [#allocation7], 4
      %s406 = int_to_ptr.vmem [resolvable:$true] %s405
      %408 = dma.vmem_to_hbm [thread:$0]  %s406, 32, %s6, [#allocation4]
    $region37: #{tpu_custom_call.1} parent=1 // pred_fallthru
      _
    // Predicated region
    $region38: #{tpu_custom_call.1} parent=1 // pred_check
      _
    $region39: #{tpu_custom_call.1} parent=1 // pred_check_branch
      %410 = sbr.rel (0) target = $region41
    $region40: #{tpu_custom_call.1} parent=1 // pred_region
      %411 = dma.done [#allocation4], 32
    $region41: #{tpu_custom_call.1} parent=1 // pred_fallthru
      _
    %412 = vsyncpa [#allocation3], 1
    %413 = vsyncpa [#allocation4], 1
    %414 = vsyncpa [#allocation5], 1

</llo_original>
